<compile_context>
chip_gen: v7x
topology: tpu7x:2x2x1
jax: 0.10.0
libtpu: 0.0.40
codegen_flags: <defaults>
</compile_context>

<pallas_src>
import functools

import jax
import jax.numpy as jnp
from jax.experimental import pallas as pl
from jax.experimental.pallas import tpu as pltpu

BN_EPS = 1e-5


# --------------------------------------------------------------------------------------
# Kernel helpers (traced inside the Pallas kernel)
# --------------------------------------------------------------------------------------
def _shifted_rows(a, mask_up, mask_dn):
    """Row-above / row-below slabs of a lane-dense (N*H, L) f32 slab.

    Built with XLU sublane rolls (no slice+concat slab copies); rows that would cross
    an image boundary (every H rows is one image) are zeroed by the precomputed masks,
    reproducing the conv's zero padding along the height axis.
    """
    NH = a.shape[0]
    prev = pltpu.roll(a, 1, axis=0) * mask_up        # prev[y] = a[y-1]
    nxt = pltpu.roll(a, NH - 1, axis=0) * mask_dn    # nxt[y]  = a[y+1]
    return prev, nxt


def _batchnorm_dense(acc, gamma_d, beta_d, W, C, m_count):
    """Training-mode BatchNorm on a lane-dense (N*H, W*C) f32 conv result.

    Per-channel sums over (N, H, W): sublane sum, then log2(W) lane rolls replicate the
    per-channel totals across every W position.  sum and sum-of-squares are stacked into
    one (2, W*C) row so each roll handles both statistics in a single XLU op.
    gamma_d/beta_d are pre-tiled (1, W*C) rows.  Conv bias is intentionally absent: it
    cancels exactly under batch-stat BN.
    """
    WC = W * C
    st = jnp.concatenate(
        [jnp.sum(acc, axis=0, keepdims=True),
         jnp.sum(acc * acc, axis=0, keepdims=True)], axis=0)      # (2, WC)
    shift = C
    while shift < WC:                                             # W is a power of two
        st = st + pltpu.roll(st, shift, axis=1)
        shift *= 2
    inv_m = 1.0 / m_count
    mean = st[0:1, :] * inv_m                                     # per-channel, replicated
    # TODO(synk): E[x^2]-E[x]^2 — use a shifted/two-pass form at real activation scales.
    var = st[1:2, :] * inv_m - mean * mean                        # biased var (PyTorch train)
    scale = gamma_d * jax.lax.rsqrt(var + BN_EPS)                 # (1, WC)
    return acc * scale + (beta_d - mean * scale)


def _residual_kernel(*refs, H, W, C, Cin, use_conv, split_taps):
    """Whole residual block, lane-dense, everything resident in VMEM.

    Inputs (use_conv=True):
      xd   : (N*H, W*Cin) f32   lane-dense input slab
      band1: (3*W*Cin, W*C)     conv1 as a block-banded row-conv matrix (matmul dtype)
      band2: (3*W*C,   W*C)     conv2 band matrix (matmul dtype)
      band3: (W*Cin,   W*C)     1x1 projection, block diagonal (matmul dtype)
      b3d  : (1, W*C) f32       conv3 bias, tiled over W
      g*/be*: (1, W*C) f32      BN gamma/beta, tiled over W
    Output:
      out  : (N*H, W*C) f32     lane-dense result
    """
    if use_conv:
        (xd_ref, band1_ref, band2_ref, band3_ref, b3d_ref,
         g1d_ref, be1d_ref, g2d_ref, be2d_ref, out_ref) = refs
    else:
        (xd_ref, band1_ref, band2_ref,
         g1d_ref, be1d_ref, g2d_ref, be2d_ref, out_ref) = refs

    NH = out_ref.shape[0]
    m_count = float(NH * W)                                       # N * H * W
    mm_dtype = band1_ref.dtype                                    # bf16 or f32

    # Border masks — hoisted: computed once, shared by both convs.
    yy = jax.lax.broadcasted_iota(jnp.int32, (NH, 1), 0) % H
    mask_up = (yy != 0).astype(jnp.float32)
    mask_dn = (yy != H - 1).astype(jnp.float32)

    def conv3x3(a, band_ref, L):
        """3x3 conv of a lane-dense f32 (NH, L) slab -> f32 (NH, W*C) accumulator."""
        prev, nxt = _shifted_rows(a, mask_up, mask_dn)
        if split_taps:
            # v5e schedule: three K=L dots, no (NH, 3L) lane-concat operand.
            acc = jnp.dot(prev.astype(mm_dtype), band_ref[0:L, :],
                          preferred_element_type=jnp.float32)
            acc = acc + jnp.dot(a.astype(mm_dtype), band_ref[L:2 * L, :],
                                preferred_element_type=jnp.float32)
            acc = acc + jnp.dot(nxt.astype(mm_dtype), band_ref[2 * L:3 * L, :],
                                preferred_element_type=jnp.float32)
            return acc
        # v6e/v7x schedule: one fused K=3L dot (larger K for the 256-deep MXU).
        taps = jnp.concatenate([prev.astype(mm_dtype), a.astype(mm_dtype),
                                nxt.astype(mm_dtype)], axis=1)
        return jnp.dot(taps, band_ref[...], preferred_element_type=jnp.float32)

    xd = xd_ref[...]                                              # f32

    # conv1 -> BN -> relu
    acc1 = conv3x3(xd, band1_ref, W * Cin)
    y1 = jnp.maximum(
        _batchnorm_dense(acc1, g1d_ref[...], be1d_ref[...], W, C, m_count), 0.0)

    # conv2 -> BN
    acc2 = conv3x3(y1, band2_ref, W * C)
    z = _batchnorm_dense(acc2, g2d_ref[...], be2d_ref[...], W, C, m_count)

    # skip path
    if use_conv:
        res = jnp.dot(xd.astype(mm_dtype), band3_ref[...],
                      preferred_element_type=jnp.float32) + b3d_ref[...]
    else:
        res = xd                                                  # identity skip, f32 exact

    out_ref[...] = jnp.maximum(z + res, 0.0)                      # dense (NH, W*C) store


# --------------------------------------------------------------------------------------
# Wrapper-side layout plumbing (weight banding, tiling, NCHW <-> dense reshapes)
# --------------------------------------------------------------------------------------
def _band_3x3(w, W):
    """HWIO (3,3,Cin,C) -> block-banded (3*W*Cin, W*C) row-conv matrix."""
    kh, kw, Cin, C = w.shape
    xs = jnp.arange(W)[:, None]
    x = jnp.arange(W)[None, :]
    dx = xs - x + 1                                               # (W, W)
    valid = (dx >= 0) & (dx < kw)
    g = w[:, jnp.clip(dx, 0, kw - 1)]                             # (kh, W, W, Cin, C)
    g = jnp.where(valid[None, :, :, None, None], g, 0.0)
    g = jnp.transpose(g, (0, 1, 3, 2, 4))                         # (kh, W, Cin, W, C)
    return g.reshape(kh * W * Cin, W * C)


def _band_1x1(w, W):
    """(Cin, C) 1x1 conv -> block-diagonal (W*Cin, W*C)."""
    Cin, C = w.shape
    eye = jnp.eye(W, dtype=w.dtype)
    return (eye[:, None, :, None] * w[None, :, None, :]).reshape(W * Cin, W * C)


def prepare_residual_params(params, W, *, use_conv, matmul_dtype=jnp.bfloat16):
    """One-time weight preparation (band matrices + tiled rows), outside the hot path."""
    w1, b1, g1, be1, w2, b2, g2, be2, w3, b3 = params
    del b1, b2                                  # cancel exactly under batch-stat BN
    C = w1.shape[-1]
    band1 = _band_3x3(w1.astype(jnp.float32), W).astype(matmul_dtype)
    band2 = _band_3x3(w2.astype(jnp.float32), W).astype(matmul_dtype)
    tile_row = lambda v: jnp.tile(v.astype(jnp.float32).reshape(1, C), (1, W))
    if use_conv:
        band3 = _band_1x1(w3.astype(jnp.float32), W).astype(matmul_dtype)
        b3d = tile_row(b3)
    else:
        band3, b3d = None, None
    return (band1, band2, band3, b3d,
            tile_row(g1), tile_row(be1), tile_row(g2), tile_row(be2))


def _is_v5e():
    try:
        kind = jax.devices()[0].device_kind.lower()
    except Exception:
        return False
    return ("v5e" in kind) or ("v5 lite" in kind) or ("v5litepod" in kind)


@functools.partial(jax.jit, static_argnames=("use_conv", "split_taps"))
def _residual_forward_jit(x_nchw, prepared, *, use_conv, split_taps):
    band1, band2, band3, b3d, g1d, be1d, g2d, be2d = prepared
    N, Cin, H, W = x_nchw.shape
    WC = g1d.shape[-1]
    C = WC // W
    assert W >= 2 and (W & (W - 1)) == 0, "lane roll-reduce needs W = power of two"
    if not use_conv:
        assert Cin == C, "identity skip needs matching channel counts"
    mm_itemsize = jnp.dtype(band1.dtype).itemsize

    x = jnp.transpose(x_nchw, (0, 2, 3, 1)).astype(jnp.float32)   # NCHW -> NHWC
    xd = x.reshape(N * H, W * Cin)                                # lane-dense input slab
    NH = N * H

    args = [xd, band1, band2]
    if use_conv:
        args += [band3, b3d]
    args += [g1d, be1d, g2d, be2d]

    kernel = functools.partial(_residual_kernel, H=H, W=W, C=C, Cin=Cin,
                               use_conv=use_conv, split_taps=split_taps)
    vmem = pl.BlockSpec(memory_space=pltpu.MemorySpace.VMEM)

    flops = 2 * NH * WC * (3 * W * Cin + 3 * WC + (W * Cin if use_conv else 0))
    bytes_in = sum(int(a.size) * int(a.dtype.itemsize) for a in args)
    bytes_out = 4 * NH * WC
    # VMEM budget from the actual resident + working set (tap operands, f32 accumulators,
    # BN temps, skip/output slabs) with 2x headroom; never below the 32 MiB scoped
    # default, capped at 128 MiB (fits v7x's 64 MiB physical only after future tiling).
    Lmax = max(W * Cin, WC)
    bytes_work = NH * (3 * Lmax * mm_itemsize + 4 * (6 * WC + 2 * Lmax))
    vmem_limit = int(min(128 << 20, max(32 << 20, 2 * (bytes_in + bytes_out + bytes_work))))

    out_dense = pl.pallas_call(
        kernel,
        out_shape=jax.ShapeDtypeStruct((NH, WC), jnp.float32),
        in_specs=[vmem] * len(args),
        out_specs=vmem,
        compiler_params=pltpu.CompilerParams(vmem_limit_bytes=vmem_limit),
        cost_estimate=pl.CostEstimate(flops=flops, transcendentals=2 * WC,
                                      bytes_accessed=bytes_in + bytes_out),
    )(*args)

    out = out_dense.reshape(N, H, W, C)
    return jnp.transpose(out, (0, 3, 1, 2))                       # NHWC -> NCHW


def residual_forward(x_nchw, prepared, *, use_conv, split_taps=None):
    """Runs the Pallas kernel. Accepts/returns PyTorch NCHW layout.

    split_taps=None auto-selects: per-dy K=L dots on v5e (128-deep MXU, no lane-concat
    operand), fused K=3L dot on v6e/v7x (256-deep MXU prefers the larger K).
    """
    if split_taps is None:
        split_taps = _is_v5e()
    return _residual_forward_jit(x_nchw, prepared, use_conv=use_conv,
                                 split_taps=bool(split_taps))


# --------------------------------------------------------------------------------------
# Reference + init
# --------------------------------------------------------------------------------------
def init_residual_params(key, input_channels, num_channels, use_conv):
    """Deterministic, PyTorch-default-style init (uniform(-1/sqrt(fan_in), +))."""
    ks = jax.random.split(key, 6)

    def u(k, shape, fan_in):
        bound = float(fan_in) ** -0.5
        return jax.random.uniform(k, shape, jnp.float32, -bound, bound)

    cin, c = input_channels, num_channels
    w1 = u(ks[0], (3, 3, cin, c), cin * 9)          # HWIO
    b1 = u(ks[1], (c,), cin * 9)
    w2 = u(ks[2], (3, 3, c, c), c * 9)
    b2 = u(ks[3], (c,), c * 9)
    if use_conv:
        w3 = u(ks[4], (cin, c), cin)                # 1x1 conv as (Cin, Cout)
        b3 = u(ks[5], (c,), cin)
    else:
        assert cin == c, "identity skip needs matching channel counts"
        w3, b3 = None, None
    g1 = jnp.ones((c,), jnp.float32)
    be1 = jnp.zeros((c,), jnp.float32)
    g2 = jnp.ones((c,), jnp.float32)
    be2 = jnp.zeros((c,), jnp.float32)
    return (w1, b1, g1, be1, w2, b2, g2, be2, w3, b3)


def residual_reference(x_nchw, params, *, use_conv):
    """Pure-JAX reference mirroring the PyTorch forward (training-mode BN)."""
    w1, b1, g1, be1, w2, b2, g2, be2, w3, b3 = params
    x = jnp.transpose(x_nchw, (0, 2, 3, 1)).astype(jnp.float32)

    def conv(v, w, b, pad):
        y = jax.lax.conv_general_dilated(
            v, w, window_strides=(1, 1), padding=((pad, pad), (pad, pad)),
            dimension_numbers=('NHWC', 'HWIO', 'NHWC'))
        return y + b

    def bn(y, g, be):
        m = jnp.mean(y, axis=(0, 1, 2), keepdims=True)
        v = jnp.mean((y - m) ** 2, axis=(0, 1, 2), keepdims=True)
        return (y - m) * jax.lax.rsqrt(v + BN_EPS) * g + be

    y = jax.nn.relu(bn(conv(x, w1, b1, 1), g1, be1))
    y = bn(conv(y, w2, b2, 1), g2, be2)
    xr = conv(x, w3.reshape(1, 1, *w3.shape), b3, 0) if use_conv else x
    return jnp.transpose(jax.nn.relu(y + xr), (0, 3, 1, 2))


if __name__ == "__main__":
    key = jax.random.PRNGKey(0)
    kx1, kp1, kx2, kp2 = jax.random.split(key, 4)

    # Case 1: Residual(4, 8, use_conv=True, stride=1) — projection skip.
    N, Cin, H, W, C = 2, 4, 16, 16, 8
    x1 = jax.random.normal(kx1, (N, Cin, H, W), jnp.float32)
    params1 = init_residual_params(kp1, Cin, C, use_conv=True)
    ref1 = residual_reference(x1, params1, use_conv=True)

    # Case 2: Residual(8, 8, use_conv=False) — identity skip (no projection matmul).
    x2 = jax.random.normal(kx2, (N, C, H, W), jnp.float32)
    params2 = init_residual_params(kp2, C, C, use_conv=False)
    ref2 = residual_reference(x2, params2, use_conv=False)

    def check(out, ref, tol):
        err = float(jnp.max(jnp.abs(out - ref)))
        scale = float(jnp.max(jnp.abs(ref)))
        assert err <= tol * (1.0 + scale), (err, scale, tol)

    # f32 matmul operands: tight tolerance, exercising BOTH tap schedules.
    prep1_f32 = prepare_residual_params(params1, W, use_conv=True, matmul_dtype=jnp.float32)
    prep2_f32 = prepare_residual_params(params2, W, use_conv=False, matmul_dtype=jnp.float32)
    for split in (False, True):
        out1 = jax.block_until_ready(
            residual_forward(x1, prep1_f32, use_conv=True, split_taps=split))
        assert out1.shape == (N, C, H, W), out1.shape
        assert bool(jnp.isfinite(out1).all())
        check(out1, ref1, 1e-4)

        out2 = jax.block_until_ready(
            residual_forward(x2, prep2_f32, use_conv=False, split_taps=split))
        check(out2, ref2, 1e-4)

    # bf16 matmul operands (native MXU dtype; f32 accumulation/BN): relative tolerance.
    prep1_bf = prepare_residual_params(params1, W, use_conv=True, matmul_dtype=jnp.bfloat16)
    out1_bf = jax.block_until_ready(residual_forward(x1, prep1_bf, use_conv=True))
    check(out1_bf, ref1, 5e-2)

    prep2_bf = prepare_residual_params(params2, W, use_conv=False, matmul_dtype=jnp.bfloat16)
    out2_bf = jax.block_until_ready(residual_forward(x2, prep2_bf, use_conv=False))
    check(out2_bf, ref2, 5e-2)

    print("KERNEL_OK")
</pallas_src>

<mosaic_0001>
module attributes {stable_mosaic.version = 11 : i64} {
  func.func @_residual_kernel(%arg0: memref<32x64xf32, #tpu.memory_space<vmem>>, %arg1: memref<192x128xf32, #tpu.memory_space<vmem>>, %arg2: memref<384x128xf32, #tpu.memory_space<vmem>>, %arg3: memref<64x128xf32, #tpu.memory_space<vmem>>, %arg4: memref<1x128xf32, #tpu.memory_space<vmem>>, %arg5: memref<1x128xf32, #tpu.memory_space<vmem>>, %arg6: memref<1x128xf32, #tpu.memory_space<vmem>>, %arg7: memref<1x128xf32, #tpu.memory_space<vmem>>, %arg8: memref<1x128xf32, #tpu.memory_space<vmem>>, %arg9: memref<32x128xf32, #tpu.memory_space<vmem>>) attributes {dimension_semantics = [], scalar_prefetch = 0 : i64, scratch_operands = 0 : i64, tpu.core_type = #tpu.core_type<tc>} {
    %0 = tpu.iota {dimensions = array<i32: 0>} : vector<32x1xi32>
    %c16_i32 = arith.constant 16 : i32
    %c0_i32 = arith.constant 0 : i32
    %1 = arith.cmpi eq, %c16_i32, %c0_i32 : i32
    %c1_i32 = arith.constant 1 : i32
    %2 = arith.select %1, %c1_i32, %c16_i32 : i32
    %3 = vector.broadcast %2 : i32 to vector<32x1xi32>
    %4 = arith.remsi %0, %3 : vector<32x1xi32>
    %c0_i32_0 = arith.constant 0 : i32
    %5 = vector.broadcast %c0_i32_0 : i32 to vector<32x1xi32>
    %6 = arith.cmpi ne, %4, %5 : vector<32x1xi32>
    %c0_i32_1 = arith.constant 0 : i32
    %7 = vector.broadcast %c0_i32_1 : i32 to vector<32x1xi32>
    %8 = arith.cmpi slt, %4, %7 : vector<32x1xi32>
    %c0_i32_2 = arith.constant 0 : i32
    %9 = arith.cmpi slt, %2, %c0_i32_2 : i32
    %10 = vector.broadcast %9 : i1 to vector<32x1xi1>
    %11 = vector.broadcast %10 : vector<32x1xi1> to vector<32x1xi1>
    %12 = arith.xori %8, %11 : vector<32x1xi1>
    %13 = arith.andi %12, %6 : vector<32x1xi1>
    %14 = vector.broadcast %2 : i32 to vector<32x1xi32>
    %15 = arith.addi %4, %14 : vector<32x1xi32>
    %16 = arith.select %13, %15, %4 : vector<32x1xi1>, vector<32x1xi32>
    %c0_i32_3 = arith.constant 0 : i32
    %17 = vector.broadcast %c0_i32_3 : i32 to vector<32x1xi32>
    %18 = arith.cmpi ne, %16, %17 : vector<32x1xi32>
    %19 = arith.extui %18 : vector<32x1xi1> to vector<32x1xi32>
    %20 = arith.sitofp %19 : vector<32x1xi32> to vector<32x1xf32>
    %c15_i32 = arith.constant 15 : i32
    %21 = vector.broadcast %c15_i32 : i32 to vector<32x1xi32>
    %22 = arith.cmpi ne, %16, %21 : vector<32x1xi32>
    %23 = arith.extui %22 : vector<32x1xi1> to vector<32x1xi32>
    %24 = arith.sitofp %23 : vector<32x1xi32> to vector<32x1xf32>
    %c0 = arith.constant 0 : index
    %c0_4 = arith.constant 0 : index
    %25 = vector.load %arg0[%c0, %c0_4] : memref<32x64xf32, #tpu.memory_space<vmem>>, vector<32x64xf32>
    %c1_i32_5 = arith.constant 1 : i32
    %26 = tpu.dynamic_rotate %25 by %c1_i32_5 dim 0 : vector<32x64xf32>, i32 -> vector<32x64xf32>
    %27 = vector.broadcast %20 : vector<32x1xf32> to vector<32x64xf32>
    %28 = arith.mulf %26, %27 : vector<32x64xf32>
    %c31_i32 = arith.constant 31 : i32
    %29 = tpu.dynamic_rotate %25 by %c31_i32 dim 0 : vector<32x64xf32>, i32 -> vector<32x64xf32>
    %30 = vector.broadcast %24 : vector<32x1xf32> to vector<32x64xf32>
    %31 = arith.mulf %29, %30 : vector<32x64xf32>
    %32 = tpu.concatenate %28, %25, %31 in 1 : vector<32x64xf32>, vector<32x64xf32>, vector<32x64xf32> -> vector<32x192xf32>
    %c0_6 = arith.constant 0 : index
    %c0_7 = arith.constant 0 : index
    %33 = vector.load %arg1[%c0_6, %c0_7] : memref<192x128xf32, #tpu.memory_space<vmem>>, vector<192x128xf32>
    %cst = arith.constant dense<0.000000e+00> : vector<32x128xf32>
    %34 = tpu.matmul %32, %33, %cst {dimension_numbers = #tpu.dot_dimension_numbers<[1], [0], [0], [1], [0, 0, 1, 1], [], []>} : vector<32x192xf32>, vector<192x128xf32>, vector<32x128xf32> -> vector<32x128xf32>
    %c0_8 = arith.constant 0 : index
    %c0_9 = arith.constant 0 : index
    %35 = vector.load %arg5[%c0_8, %c0_9] : memref<1x128xf32, #tpu.memory_space<vmem>>, vector<1x128xf32>
    %c0_10 = arith.constant 0 : index
    %c0_11 = arith.constant 0 : index
    %36 = vector.load %arg6[%c0_10, %c0_11] : memref<1x128xf32, #tpu.memory_space<vmem>>, vector<1x128xf32>
    %cst_12 = arith.constant dense<0.000000e+00> : vector<128xf32>
    %37 = vector.multi_reduction <add>, %34, %cst_12 [0] : vector<32x128xf32> to vector<128xf32>
    %38 = vector.shape_cast %37 : vector<128xf32> to vector<1x128xf32>
    %39 = arith.mulf %34, %34 : vector<32x128xf32>
    %cst_13 = arith.constant dense<0.000000e+00> : vector<128xf32>
    %40 = vector.multi_reduction <add>, %39, %cst_13 [0] : vector<32x128xf32> to vector<128xf32>
    %41 = vector.shape_cast %40 : vector<128xf32> to vector<1x128xf32>
    %42 = tpu.concatenate %38, %41 in 0 : vector<1x128xf32>, vector<1x128xf32> -> vector<2x128xf32>
    %c8_i32 = arith.constant 8 : i32
    %43 = tpu.dynamic_rotate %42 by %c8_i32 dim 1 : vector<2x128xf32>, i32 -> vector<2x128xf32>
    %44 = arith.addf %42, %43 : vector<2x128xf32>
    %c16_i32_14 = arith.constant 16 : i32
    %45 = tpu.dynamic_rotate %44 by %c16_i32_14 dim 1 : vector<2x128xf32>, i32 -> vector<2x128xf32>
    %46 = arith.addf %44, %45 : vector<2x128xf32>
    %c32_i32 = arith.constant 32 : i32
    %47 = tpu.dynamic_rotate %46 by %c32_i32 dim 1 : vector<2x128xf32>, i32 -> vector<2x128xf32>
    %48 = arith.addf %46, %47 : vector<2x128xf32>
    %c64_i32 = arith.constant 64 : i32
    %49 = tpu.dynamic_rotate %48 by %c64_i32 dim 1 : vector<2x128xf32>, i32 -> vector<2x128xf32>
    %50 = arith.addf %48, %49 : vector<2x128xf32>
    %51 = vector.extract_strided_slice %50 {offsets = [0, 0], sizes = [1, 128], strides = [1, 1]} : vector<2x128xf32> to vector<1x128xf32>
    %cst_15 = arith.constant 0.001953125 : f32
    %52 = vector.broadcast %cst_15 : f32 to vector<1x128xf32>
    %53 = arith.mulf %51, %52 : vector<1x128xf32>
    %54 = vector.extract_strided_slice %50 {offsets = [1, 0], sizes = [1, 128], strides = [1, 1]} : vector<2x128xf32> to vector<1x128xf32>
    %cst_16 = arith.constant 0.001953125 : f32
    %55 = vector.broadcast %cst_16 : f32 to vector<1x128xf32>
    %56 = arith.mulf %54, %55 : vector<1x128xf32>
    %57 = arith.mulf %53, %53 : vector<1x128xf32>
    %58 = arith.subf %56, %57 : vector<1x128xf32>
    %cst_17 = arith.constant 9.99999974E-6 : f32
    %59 = vector.broadcast %cst_17 : f32 to vector<1x128xf32>
    %60 = arith.addf %58, %59 : vector<1x128xf32>
    %61 = math.rsqrt %60 : vector<1x128xf32>
    %62 = arith.mulf %35, %61 : vector<1x128xf32>
    %63 = vector.broadcast %62 : vector<1x128xf32> to vector<32x128xf32>
    %64 = arith.mulf %34, %63 : vector<32x128xf32>
    %65 = arith.mulf %53, %62 : vector<1x128xf32>
    %66 = arith.subf %36, %65 : vector<1x128xf32>
    %67 = vector.broadcast %66 : vector<1x128xf32> to vector<32x128xf32>
    %68 = arith.addf %64, %67 : vector<32x128xf32>
    %cst_18 = arith.constant 0.000000e+00 : f32
    %69 = vector.broadcast %cst_18 : f32 to vector<32x128xf32>
    %70 = arith.maximumf %68, %69 : vector<32x128xf32>
    %c1_i32_19 = arith.constant 1 : i32
    %71 = tpu.dynamic_rotate %70 by %c1_i32_19 dim 0 : vector<32x128xf32>, i32 -> vector<32x128xf32>
    %72 = vector.broadcast %20 : vector<32x1xf32> to vector<32x128xf32>
    %73 = arith.mulf %71, %72 : vector<32x128xf32>
    %c31_i32_20 = arith.constant 31 : i32
    %74 = tpu.dynamic_rotate %70 by %c31_i32_20 dim 0 : vector<32x128xf32>, i32 -> vector<32x128xf32>
    %75 = vector.broadcast %24 : vector<32x1xf32> to vector<32x128xf32>
    %76 = arith.mulf %74, %75 : vector<32x128xf32>
    %77 = tpu.concatenate %73, %70, %76 in 1 : vector<32x128xf32>, vector<32x128xf32>, vector<32x128xf32> -> vector<32x384xf32>
    %c0_21 = arith.constant 0 : index
    %c0_22 = arith.constant 0 : index
    %78 = vector.load %arg2[%c0_21, %c0_22] : memref<384x128xf32, #tpu.memory_space<vmem>>, vector<384x128xf32>
    %cst_23 = arith.constant dense<0.000000e+00> : vector<32x128xf32>
    %79 = tpu.matmul %77, %78, %cst_23 {dimension_numbers = #tpu.dot_dimension_numbers<[1], [0], [0], [1], [0, 0, 1, 1], [], []>} : vector<32x384xf32>, vector<384x128xf32>, vector<32x128xf32> -> vector<32x128xf32>
    %c0_24 = arith.constant 0 : index
    %c0_25 = arith.constant 0 : index
    %80 = vector.load %arg7[%c0_24, %c0_25] : memref<1x128xf32, #tpu.memory_space<vmem>>, vector<1x128xf32>
    %c0_26 = arith.constant 0 : index
    %c0_27 = arith.constant 0 : index
    %81 = vector.load %arg8[%c0_26, %c0_27] : memref<1x128xf32, #tpu.memory_space<vmem>>, vector<1x128xf32>
    %cst_28 = arith.constant dense<0.000000e+00> : vector<128xf32>
    %82 = vector.multi_reduction <add>, %79, %cst_28 [0] : vector<32x128xf32> to vector<128xf32>
    %83 = vector.shape_cast %82 : vector<128xf32> to vector<1x128xf32>
    %84 = arith.mulf %79, %79 : vector<32x128xf32>
    %cst_29 = arith.constant dense<0.000000e+00> : vector<128xf32>
    %85 = vector.multi_reduction <add>, %84, %cst_29 [0] : vector<32x128xf32> to vector<128xf32>
    %86 = vector.shape_cast %85 : vector<128xf32> to vector<1x128xf32>
    %87 = tpu.concatenate %83, %86 in 0 : vector<1x128xf32>, vector<1x128xf32> -> vector<2x128xf32>
    %c8_i32_30 = arith.constant 8 : i32
    %88 = tpu.dynamic_rotate %87 by %c8_i32_30 dim 1 : vector<2x128xf32>, i32 -> vector<2x128xf32>
    %89 = arith.addf %87, %88 : vector<2x128xf32>
    %c16_i32_31 = arith.constant 16 : i32
    %90 = tpu.dynamic_rotate %89 by %c16_i32_31 dim 1 : vector<2x128xf32>, i32 -> vector<2x128xf32>
    %91 = arith.addf %89, %90 : vector<2x128xf32>
    %c32_i32_32 = arith.constant 32 : i32
    %92 = tpu.dynamic_rotate %91 by %c32_i32_32 dim 1 : vector<2x128xf32>, i32 -> vector<2x128xf32>
    %93 = arith.addf %91, %92 : vector<2x128xf32>
    %c64_i32_33 = arith.constant 64 : i32
    %94 = tpu.dynamic_rotate %93 by %c64_i32_33 dim 1 : vector<2x128xf32>, i32 -> vector<2x128xf32>
    %95 = arith.addf %93, %94 : vector<2x128xf32>
    %96 = vector.extract_strided_slice %95 {offsets = [0, 0], sizes = [1, 128], strides = [1, 1]} : vector<2x128xf32> to vector<1x128xf32>
    %cst_34 = arith.constant 0.001953125 : f32
    %97 = vector.broadcast %cst_34 : f32 to vector<1x128xf32>
    %98 = arith.mulf %96, %97 : vector<1x128xf32>
    %99 = vector.extract_strided_slice %95 {offsets = [1, 0], sizes = [1, 128], strides = [1, 1]} : vector<2x128xf32> to vector<1x128xf32>
    %cst_35 = arith.constant 0.001953125 : f32
    %100 = vector.broadcast %cst_35 : f32 to vector<1x128xf32>
    %101 = arith.mulf %99, %100 : vector<1x128xf32>
    %102 = arith.mulf %98, %98 : vector<1x128xf32>
    %103 = arith.subf %101, %102 : vector<1x128xf32>
    %cst_36 = arith.constant 9.99999974E-6 : f32
    %104 = vector.broadcast %cst_36 : f32 to vector<1x128xf32>
    %105 = arith.addf %103, %104 : vector<1x128xf32>
    %106 = math.rsqrt %105 : vector<1x128xf32>
    %107 = arith.mulf %80, %106 : vector<1x128xf32>
    %108 = vector.broadcast %107 : vector<1x128xf32> to vector<32x128xf32>
    %109 = arith.mulf %79, %108 : vector<32x128xf32>
    %110 = arith.mulf %98, %107 : vector<1x128xf32>
    %111 = arith.subf %81, %110 : vector<1x128xf32>
    %112 = vector.broadcast %111 : vector<1x128xf32> to vector<32x128xf32>
    %113 = arith.addf %109, %112 : vector<32x128xf32>
    %c0_37 = arith.constant 0 : index
    %c0_38 = arith.constant 0 : index
    %114 = vector.load %arg3[%c0_37, %c0_38] : memref<64x128xf32, #tpu.memory_space<vmem>>, vector<64x128xf32>
    %cst_39 = arith.constant dense<0.000000e+00> : vector<32x128xf32>
    %115 = tpu.matmul %25, %114, %cst_39 {dimension_numbers = #tpu.dot_dimension_numbers<[1], [0], [0], [1], [0, 0, 1, 1], [], []>} : vector<32x64xf32>, vector<64x128xf32>, vector<32x128xf32> -> vector<32x128xf32>
    %c0_40 = arith.constant 0 : index
    %c0_41 = arith.constant 0 : index
    %116 = vector.load %arg4[%c0_40, %c0_41] : memref<1x128xf32, #tpu.memory_space<vmem>>, vector<1x128xf32>
    %117 = vector.broadcast %116 : vector<1x128xf32> to vector<32x128xf32>
    %118 = arith.addf %115, %117 : vector<32x128xf32>
    %119 = arith.addf %113, %118 : vector<32x128xf32>
    %cst_42 = arith.constant 0.000000e+00 : f32
    %120 = vector.broadcast %cst_42 : f32 to vector<32x128xf32>
    %121 = arith.maximumf %119, %120 : vector<32x128xf32>
    %c0_43 = arith.constant 0 : index
    %c0_44 = arith.constant 0 : index
    %122 = vector.load %arg9[%c0_43, %c0_44] : memref<32x128xf32, #tpu.memory_space<vmem>>, vector<32x128xf32>
    tpu.vector_store %arg9[%c0_43, %c0_44], %121 {strides = array<i32>} : memref<32x128xf32, #tpu.memory_space<vmem>>, vector<32x128xf32>,
    return
  }
}

</mosaic_0001>

<llo_original>
// kernel: _residual_forward_jit.1
$region0: #{_residual_forward_jit.1}
  #allocation0 [shape = 'u32[]', space=smem, size = 0x4, offset = 0x4, fixed_abs, tag = 'smem constant byte address 0x4 - core index']
  #allocation1 [shape = 'u32[144,128]{1,0:T(1,128)}', space=vmem, size = 0x12000, scoped, tag = 'internal scratch']
  %s0 = inlined_call_operand.vmem [shape: f32[32,64], index: 0, kind: input, shape index: {}]
  %s1 = inlined_call_operand.hbm [shape: f32[192,128], index: 1, kind: input, shape index: {}]
  %s2 = inlined_call_operand.vmem [shape: f32[384,128], index: 2, kind: input, shape index: {}]
  %s3 = inlined_call_operand.vmem [shape: f32[64,128], index: 3, kind: input, shape index: {}]
  %s4 = inlined_call_operand.vmem [shape: f32[1,128], index: 4, kind: input, shape index: {}]
  %s5 = inlined_call_operand.vmem [shape: f32[1,128], index: 5, kind: input, shape index: {}]
  %s6 = inlined_call_operand.vmem [shape: f32[1,128], index: 6, kind: input, shape index: {}]
  %s7 = inlined_call_operand.vmem [shape: f32[1,128], index: 7, kind: input, shape index: {}]
  %s8 = inlined_call_operand.vmem [shape: f32[1,128], index: 8, kind: input, shape index: {}]
  %s9 = inlined_call_operand.vmem [shape: f32[32,128], index: 9, kind: output, shape index: {}]
  %s10 = sld [smem:[#allocation0]]
  $region50: #{_residual_forward_jit.1} parent=0
    _
  %s12 = ssub.s32 1, %s10
  %s13 = scalar_select 0, %s12, %s10
  $region1: #{_residual_forward_jit.1} parent=0
    #allocation2 [shape = 'u8[98304]{0}', space=vmem, size = 0x18000, scoped, tag = 'input window, operand 1, single buffered']
    #allocation3 [shape = 's32[1]{0}', space=sflag, size = 0x4, scoped, tag = 'scoped memory for _residual_forward_jit.1']
    %14 = vsyncpa [#allocation3], 0
    // Predicated region
    $region2: #{_residual_forward_jit.1} parent=1 // pred_check
      _
    $region3: #{_residual_forward_jit.1} parent=1 // pred_check_branch
      %16 = sbr.rel (0) target = $region5
    $region4: #{_residual_forward_jit.1} parent=1 // pred_region
      _
    $region5: #{_residual_forward_jit.1} parent=1 // pred_fallthru
      _
    // Predicated region
    $region6: #{_residual_forward_jit.1} parent=1 // pred_check
      _
    $region7: #{_residual_forward_jit.1} parent=1 // pred_check_branch
      %18 = sbr.rel (0) target = $region9
    $region8: #{_residual_forward_jit.1} parent=1 // pred_region
      %s20 = ssub.s32 3072, 3072
      %21 = vsyncadd [#allocation3], %s20
      %s22 = sshll.u32 [#allocation2], 4
      %s23 = int_to_ptr.vmem [resolvable:$true] %s22
      %28 = dma.hbm_to_vmem [thread:$0]  %s1, 3072, %s23, [#allocation3], 128, 128, 8
    $region9: #{_residual_forward_jit.1} parent=1 // pred_fallthru
      _
    // Predicated region
    $region10: #{_residual_forward_jit.1} parent=1 // pred_check
      _
    $region11: #{_residual_forward_jit.1} parent=1 // pred_check_branch
      %30 = sbr.rel (0) target = $region13
    $region12: #{_residual_forward_jit.1} parent=1 // pred_region
      _
    $region13: #{_residual_forward_jit.1} parent=1 // pred_fallthru
      _
    // Predicated region
    $region14: #{_residual_forward_jit.1} parent=1 // pred_check
      _
    $region15: #{_residual_forward_jit.1} parent=1 // pred_check_branch
      %32 = sbr.rel (0) target = $region17
    $region16: #{_residual_forward_jit.1} parent=1 // pred_region
      _
    $region17: #{_residual_forward_jit.1} parent=1 // pred_fallthru
      _
    // Predicated region
    $region18: #{_residual_forward_jit.1} parent=1 // pred_check
      _
    $region19: #{_residual_forward_jit.1} parent=1 // pred_check_branch
      %34 = sbr.rel (0) target = $region21
    $region20: #{_residual_forward_jit.1} parent=1 // pred_region
      _
    $region21: #{_residual_forward_jit.1} parent=1 // pred_fallthru
      _
    // Predicated region
    $region22: #{_residual_forward_jit.1} parent=1 // pred_check
      _
    $region23: #{_residual_forward_jit.1} parent=1 // pred_check_branch
      %36 = sbr.rel (0) target = $region25
    $region24: #{_residual_forward_jit.1} parent=1 // pred_region
      _
    $region25: #{_residual_forward_jit.1} parent=1 // pred_fallthru
      _
    // Predicated region
    $region26: #{_residual_forward_jit.1} parent=1 // pred_check
      _
    $region27: #{_residual_forward_jit.1} parent=1 // pred_check_branch
      %38 = sbr.rel (0) target = $region29
    $region28: #{_residual_forward_jit.1} parent=1 // pred_region
      _
    $region29: #{_residual_forward_jit.1} parent=1 // pred_fallthru
      _
    // Predicated region
    $region30: #{_residual_forward_jit.1} parent=1 // pred_check
      _
    $region31: #{_residual_forward_jit.1} parent=1 // pred_check_branch
      %40 = sbr.rel (0) target = $region33
    $region32: #{_residual_forward_jit.1} parent=1 // pred_region
      _
    $region33: #{_residual_forward_jit.1} parent=1 // pred_fallthru
      _
    // Predicated region
    $region34: #{_residual_forward_jit.1} parent=1 // pred_check
      _
    $region35: #{_residual_forward_jit.1} parent=1 // pred_check_branch
      %42 = sbr.rel (0) target = $region37
    $region36: #{_residual_forward_jit.1} parent=1 // pred_region
      _
    $region37: #{_residual_forward_jit.1} parent=1 // pred_fallthru
      _
    // Predicated region
    $region38: #{_residual_forward_jit.1} parent=1 // pred_check
      _
    $region39: #{_residual_forward_jit.1} parent=1 // pred_check_branch
      %44 = sbr.rel (0) target = $region41
    $region40: #{_residual_forward_jit.1} parent=1 // pred_region
      %45 = dma.done [#allocation3], 3072
    $region41: #{_residual_forward_jit.1} parent=1 // pred_fallthru
      _
    %v46 = vlaneseq
    %v47 = vshrl.u32 %v46, 7
    %v48 = vadd.s32 %v47, 8
    %v49 = vadd.s32 %v47, 16
    %v50 = vadd.s32 %v47, 24
    %vm51 = vcmp.lt.s32.totalorder %v47, 0
    %v52 = vsub.s32 0, %v47
    %v53 = vsel %vm51, %v52, %v47
    %v54 = vshrl.u32 %v53, 4
    %v55 = vand.u32 %v53, 15
    %v56 = vsub.s32 0, %v55
    %v57 = vsel %vm51, %v56, %v55
    %vm58 = vcmp.lt.s32.totalorder %v48, 0
    %v59 = vsub.s32 0, %v48
    %v60 = vsel %vm58, %v59, %v48
    %v61 = vshrl.u32 %v60, 4
    %v62 = vand.u32 %v60, 15
    %v63 = vsub.s32 0, %v62
    %v64 = vsel %vm58, %v63, %v62
    %vm65 = vcmp.lt.s32.totalorder %v49, 0
    %v66 = vsub.s32 0, %v49
    %v67 = vsel %vm65, %v66, %v49
    %v68 = vshrl.u32 %v67, 4
    %v69 = vand.u32 %v67, 15
    %v70 = vsub.s32 0, %v69
    %v71 = vsel %vm65, %v70, %v69
    %vm72 = vcmp.lt.s32.totalorder %v50, 0
    %v73 = vsub.s32 0, %v50
    %v74 = vsel %vm72, %v73, %v50
    %v75 = vshrl.u32 %v74, 4
    %v76 = vand.u32 %v74, 15
    %v77 = vsub.s32 0, %v76
    %v78 = vsel %vm72, %v77, %v76
    %vm79 = vcmp.ne.s32.totalorder %v57, 0
    %vm80 = vcmp.ne.s32.totalorder %v64, 0
    %vm81 = vcmp.ne.s32.totalorder %v71, 0
    %vm82 = vcmp.ne.s32.totalorder %v78, 0
    %vm83 = vcmp.lt.s32.totalorder %v57, 0
    %vm84 = vcmp.lt.s32.totalorder %v64, 0
    %vm85 = vcmp.lt.s32.totalorder %v71, 0
    %vm86 = vcmp.lt.s32.totalorder %v78, 0
    %vm87 = vmand %vm83, %vm79
    %vm88 = vmand %vm84, %vm80
    %vm89 = vmand %vm85, %vm81
    %vm90 = vmand %vm86, %vm82
    %v91 = vadd.s32 %v57, 16
    %v92 = vadd.s32 %v64, 16
    %v93 = vadd.s32 %v71, 16
    %v94 = vadd.s32 %v78, 16
    %v95 = vsel %vm87, %v91, %v57
    %v96 = vsel %vm88, %v92, %v64
    %v97 = vsel %vm89, %v93, %v71
    %v98 = vsel %vm90, %v94, %v78
    %vm99 = vcmp.ne.s32.totalorder %v95, 0
    %vm100 = vcmp.ne.s32.totalorder %v96, 0
    %vm101 = vcmp.ne.s32.totalorder %v97, 0
    %vm102 = vcmp.ne.s32.totalorder %v98, 0
    %v103 = vsel %vm99, 1, 0
    %v104 = vsel %vm100, 1, 0
    %v105 = vsel %vm101, 1, 0
    %v106 = vsel %vm102, 1, 0
    %v107 = vcvt.s32.f32 %v103
    %v108 = vcvt.s32.f32 %v104
    %v109 = vcvt.s32.f32 %v105
    %v110 = vcvt.s32.f32 %v106
    %vm111 = vcmp.ne.s32.totalorder %v95, 15
    %vm112 = vcmp.ne.s32.totalorder %v96, 15
    %vm113 = vcmp.ne.s32.totalorder %v97, 15
    %vm114 = vcmp.ne.s32.totalorder %v98, 15
    %v115 = vsel %vm111, 1, 0
    %v116 = vsel %vm112, 1, 0
    %v117 = vsel %vm113, 1, 0
    %v118 = vsel %vm114, 1, 0
    %v119 = vcvt.s32.f32 %v115
    %v120 = vcvt.s32.f32 %v116
    %v121 = vcvt.s32.f32 %v117
    %v122 = vcvt.s32.f32 %v118
    %v123 = vld [vmem:[%s0] sm:$0xff]
    %v124 = vld [vmem:[%s0 + $0x8] sm:$0xff]
    %v125 = vld [vmem:[%s0 + $0x10] sm:$0xff]
    %v126 = vld [vmem:[%s0 + $0x18] sm:$0xff]
    %v127 = vrot.slane %v123, 7
    %v128 = vrot.slane %v124, 7
    %v129 = vrot.slane %v125, 7
    %v130 = vrot.slane %v126, 7
    %vm131 = vcmp.lt.s32.totalorder %v47, 1
    %v132 = vsel %vm131, %v129, %v130
    %v133 = vsel %vm131, %v128, %v129
    %v134 = vsel %vm131, %v127, %v128
    %v135 = vsel %vm131, %v130, %v127
    %v136 = vmul.f32 %v135, %v107
    %v137 = vmul.f32 %v134, %v108
    %v138 = vmul.f32 %v133, %v109
    %v139 = vmul.f32 %v132, %v110
    %v140 = vrot.slane %v123, 1
    %v141 = vrot.slane %v124, 1
    %v142 = vrot.slane %v125, 1
    %v143 = vrot.slane %v126, 1
    %vm144 = vcmp.lt.s32.totalorder %v47, 7
    %v145 = vsel %vm144, %v142, %v143
    %v146 = vsel %vm144, %v141, %v142
    %v147 = vsel %vm144, %v140, %v141
    %v148 = vsel %vm144, %v143, %v140
    %v149 = vmul.f32 %v147, %v119
    %v150 = vmul.f32 %v146, %v120
    %v151 = vmul.f32 %v145, %v121
    %v152 = vmul.f32 %v148, %v122
    %157 = vrot.lane.b32.xlu0 %v123, 64
    %v158 = vpop.permute.xlu0 %157
    %159 = vrot.lane.b32.xlu0 %v124, 64
    %v160 = vpop.permute.xlu0 %159
    %161 = vrot.lane.b32.xlu0 %v125, 64
    %v162 = vpop.permute.xlu0 %161
    %163 = vrot.lane.b32.xlu0 %v126, 64
    %v164 = vpop.permute.xlu0 %163
    %vm169 = vcmask 523264
    %v170 = vsel %vm169, %v136, %v158
    %v171 = vsel %vm169, %v137, %v160
    %v172 = vsel %vm169, %v138, %v162
    %v173 = vsel %vm169, %v139, %v164
    %v174 = vld [vmem:[#allocation2] sm:$0xff]
    %v175 = vld [vmem:[#allocation2 + $0x8] sm:$0xff]
    %v176 = vld [vmem:[#allocation2 + $0x10] sm:$0xff]
    %v177 = vld [vmem:[#allocation2 + $0x18] sm:$0xff]
    %v178 = vld [vmem:[#allocation2 + $0x20] sm:$0xff]
    %v179 = vld [vmem:[#allocation2 + $0x28] sm:$0xff]
    %v180 = vld [vmem:[#allocation2 + $0x30] sm:$0xff]
    %v181 = vld [vmem:[#allocation2 + $0x38] sm:$0xff]
    %v182 = vld [vmem:[#allocation2 + $0x40] sm:$0xff]
    %v183 = vld [vmem:[#allocation2 + $0x48] sm:$0xff]
    %v184 = vld [vmem:[#allocation2 + $0x50] sm:$0xff]
    %v185 = vld [vmem:[#allocation2 + $0x58] sm:$0xff]
    %v186 = vld [vmem:[#allocation2 + $0x60] sm:$0xff]
    %v187 = vld [vmem:[#allocation2 + $0x68] sm:$0xff]
    %v188 = vld [vmem:[#allocation2 + $0x70] sm:$0xff]
    %v189 = vld [vmem:[#allocation2 + $0x78] sm:$0xff]
    %v190 = vld [vmem:[#allocation2 + $0x80] sm:$0xff]
    %v191 = vld [vmem:[#allocation2 + $0x88] sm:$0xff]
    %v192 = vld [vmem:[#allocation2 + $0x90] sm:$0xff]
    %v193 = vld [vmem:[#allocation2 + $0x98] sm:$0xff]
    %v194 = vld [vmem:[#allocation2 + $0xa0] sm:$0xff]
    %v195 = vld [vmem:[#allocation2 + $0xa8] sm:$0xff]
    %v196 = vld [vmem:[#allocation2 + $0xb0] sm:$0xff]
    %v197 = vld [vmem:[#allocation2 + $0xb8] sm:$0xff]
    %v199 = vsel %vm169, %v149, 0
    %v202 = vsel %vm169, %v150, 0
    %v205 = vsel %vm169, %v151, 0
    %v208 = vsel %vm169, %v152, 0
    %210 = vmatprep.subr.mxu0 0.0
    %211 = vmatpush1.msra.mxu0 %v174
    %212 = vmatprep.subr.mxu0 0.0
    %213 = vmatpush1.msra.mxu0 %v175
    %214 = vmatprep.subr.mxu0 0.0
    %215 = vmatpush1.msra.mxu0 %v176
    %216 = vmatprep.subr.mxu0 0.0
    %217 = vmatpush1.msra.mxu0 %v177
    %218 = vmatprep.subr.mxu0 0.0
    %219 = vmatpush1.msra.mxu0 %v178
    %220 = vmatprep.subr.mxu0 0.0
    %221 = vmatpush1.msra.mxu0 %v179
    %222 = vmatprep.subr.mxu0 0.0
    %223 = vmatpush1.msra.mxu0 %v180
    %224 = vmatprep.subr.mxu0 0.0
    %225 = vmatpush1.msra.mxu0 %v181
    %226 = vmatprep.subr.mxu0 0.0
    %227 = vmatpush1.msra.mxu0 %v182
    %228 = vmatprep.subr.mxu0 0.0
    %229 = vmatpush1.msra.mxu0 %v183
    %230 = vmatprep.subr.mxu0 0.0
    %231 = vmatpush1.msra.mxu0 %v184
    %232 = vmatprep.subr.mxu0 0.0
    %233 = vmatpush1.msra.mxu0 %v185
    %234 = vmatprep.subr.mxu0 0.0
    %235 = vmatpush1.msra.mxu0 %v186
    %236 = vmatprep.subr.mxu0 0.0
    %237 = vmatpush1.msra.mxu0 %v187
    %238 = vmatprep.subr.mxu0 0.0
    %239 = vmatpush1.msra.mxu0 %v188
    %240 = vmatprep.subr.mxu0 0.0
    %241 = vmatpush1.msra.mxu0 %v189
    %242 = vmatprep.subr.mxu0 0.0
    %243 = vmatpush1.msra.mxu0 %v190
    %244 = vmatprep.subr.mxu0 0.0
    %245 = vmatpush1.msra.mxu0 %v191
    %246 = vmatprep.subr.mxu0 0.0
    %247 = vmatpush1.msra.mxu0 %v192
    %248 = vmatprep.subr.mxu0 0.0
    %249 = vmatpush1.msra.mxu0 %v193
    %250 = vmatprep.subr.mxu0 0.0
    %251 = vmatpush1.msra.mxu0 %v194
    %252 = vmatprep.subr.mxu0 0.0
    %253 = vmatpush1.msra.mxu0 %v195
    %254 = vmatprep.subr.mxu0 0.0
    %255 = vmatpush1.msra.mxu0 %v196
    %256 = vmatprep.subr.mxu0 0.0
    %257 = vmatpush1.msra.mxu0 %v197
    %258 = vmatprep.subr.mxu0 0.0
    %259 = vmatpush1.msra.mxu0 0.0
    %260 = vmatprep.subr.mxu0 0.0
    %261 = vmatpush1.msra.mxu0 0.0
    %262 = vmatprep.subr.mxu0 0.0
    %263 = vmatpush1.msra.mxu0 0.0
    %264 = vmatprep.subr.mxu0 0.0
    %265 = vmatpush1.msra.mxu0 0.0
    %266 = vmatprep.subr.mxu0 0.0
    %267 = vmatpush1.msra.mxu0 0.0
    %268 = vmatprep.subr.mxu0 0.0
    %269 = vmatpush1.msra.mxu0 0.0
    %270 = vmatprep.subr.mxu0 0.0
    %271 = vmatpush1.msra.mxu0 0.0
    %272 = vmatprep.subr.mxu0 0.0
    %273 = vmatpush1.msra.mxu0 0.0
    %274 = vmatprep.mubr.f32.mxu0 %v199
    %275 = vmatmul.mubr.f32.gmra.mrb[0].mxu0 %v170
    %v276 = vpop.f32.mrb[0].mxu0
    %v277 = vadd.f32 0.0, %v276
    %v278 = vpop.f32.mrb[0].mxu0
    %279 = vmatprep.mubr.f32.mxu0 %v202
    %280 = vmatmul.mubr.f32.gmra.mrb[0].mxu0 %v171
    %v281 = vpop.f32.mrb[0].mxu0
    %v282 = vadd.f32 0.0, %v281
    %v283 = vpop.f32.mrb[0].mxu0
    %284 = vmatprep.mubr.f32.mxu0 %v205
    %285 = vmatmul.mubr.f32.gmra.mrb[0].mxu0 %v172
    %v286 = vpop.f32.mrb[0].mxu0
    %v287 = vadd.f32 0.0, %v286
    %v288 = vpop.f32.mrb[0].mxu0
    %289 = vmatprep.mubr.f32.mxu0 %v208
    %290 = vmatmul.mubr.f32.gmra.mrb[0].mxu0 %v173
    %v291 = vpop.f32.mrb[0].mxu0
    %v292 = vadd.f32 0.0, %v291
    %v293 = vpop.f32.mrb[0].mxu0
    %294 = vdwg.mxu0
    %v295 = vld [vmem:[%s5] sm:$0x1]
    %v296 = vld [vmem:[%s6] sm:$0x1]
    %v297 = vadd.f32 %v277, %v282
    %v298 = vadd.f32 %v297, %v287
    %v299 = vadd.f32 %v298, %v292
    %v300 = vrot.slane %v299, 4
    %v301 = vadd.f32 %v299, %v300
    %v302 = vrot.slane %v301, 2
    %v303 = vadd.f32 %v301, %v302
    %v304 = vrot.slane %v303, 1
    %v305 = vadd.f32 %v303, %v304
    %v306 = vmul.f32 %v277, %v277
    %v307 = vmul.f32 %v282, %v282
    %v308 = vmul.f32 %v287, %v287
    %v309 = vmul.f32 %v292, %v292
    %v310 = vadd.f32 %v306, %v307
    %v311 = vadd.f32 %v310, %v308
    %v312 = vadd.f32 %v311, %v309
    %v313 = vrot.slane %v312, 4
    %v314 = vadd.f32 %v312, %v313
    %v315 = vrot.slane %v314, 2
    %v316 = vadd.f32 %v314, %v315
    %v317 = vrot.slane %v316, 1
    %v318 = vadd.f32 %v316, %v317
    %vm319 = vcmask 1040384
    %v320 = vsel %vm319, %v305, %v318
    %321 = vrot.lane.b32.xlu0 %v320, 8
    %v322 = vpop.permute.xlu0 %321
    %v323 = vadd.f32 %v320, %v322
    %324 = vrot.lane.b32.xlu0 %v323, 16
    %v325 = vpop.permute.xlu0 %324
    %v326 = vadd.f32 %v323, %v325
    %327 = vrot.lane.b32.xlu0 %v326, 32
    %v328 = vpop.permute.xlu0 %327
    %v329 = vadd.f32 %v326, %v328
    %330 = vrot.lane.b32.xlu0 %v329, 64
    %v331 = vpop.permute.xlu0 %330
    %v332 = vadd.f32 %v329, %v331
    %v333 = vmul.f32 %v332, 0.001953125
    %v334 = vmul.f32 %v333, %v333
    %v336 = vrot.slane %v334, 7
    %v338 = vsub.f32 %v333, %v336
    %v339 = vadd.f32 %v338, 1e-05
    %v340 = vrsqrt.pop %v339
    %v343 = vunpack.c.l.s4 1966171168
    %v344 = vunpack.c.0.s8 %v343
    %v345 = vlaneseq
    %v346 = vshrl.u32 %v345, 7
    %v347 = vsub.s32 %v344, %v346
    %v348 = vrot.slane %v340, %v347
    %v349 = vcombine.high %v348, %v348
    %v351 = vunpack.c.l.s4 1966171168
    %v352 = vunpack.c.0.s8 %v351
    %v353 = vlaneseq
    %v354 = vshrl.u32 %v353, 7
    %v355 = vsub.s32 %v352, %v354
    %v356 = vrot.slane %v349, %v355
    %v358 = vmul.f32 %v295, %v356
    %v360 = vlaneseq
    %v361 = vshrl.u32 %v360, 7
    %v362 = vsub.s32 0, %v361
    %v363 = vrot.slane %v358, %v362
    %v365 = vmul.f32 %v277, %v363
    %v366 = vmul.f32 %v282, %v363
    %v367 = vmul.f32 %v287, %v363
    %v368 = vmul.f32 %v292, %v363
    %v369 = vmul.f32 %v333, %v358
    %v370 = vsub.f32 %v296, %v369
    %v372 = vlaneseq
    %v373 = vshrl.u32 %v372, 7
    %v374 = vsub.s32 0, %v373
    %v375 = vrot.slane %v370, %v374
    %v377 = vadd.f32 %v365, %v375
    %v378 = vadd.f32 %v366, %v375
    %v379 = vadd.f32 %v367, %v375
    %v380 = vadd.f32 %v368, %v375
    %v381 = vmax.f32 %v377, 0.0
    %v382 = vmax.f32 %v378, 0.0
    %v383 = vmax.f32 %v379, 0.0
    %v384 = vmax.f32 %v380, 0.0
    %v385 = vrot.slane %v381, 7
    %v386 = vrot.slane %v382, 7
    %v387 = vrot.slane %v383, 7
    %v388 = vrot.slane %v384, 7
    %v389 = vsel %vm131, %v387, %v388
    %v390 = vsel %vm131, %v386, %v387
    %v391 = vsel %vm131, %v385, %v386
    %v392 = vsel %vm131, %v388, %v385
    %v393 = vmul.f32 %v392, %v107
    %v394 = vmul.f32 %v391, %v108
    %v395 = vmul.f32 %v390, %v109
    %v396 = vmul.f32 %v389, %v110
    %v397 = vrot.slane %v381, 1
    %v398 = vrot.slane %v382, 1
    %v399 = vrot.slane %v383, 1
    %v400 = vrot.slane %v384, 1
    %v401 = vsel %vm144, %v399, %v400
    %v402 = vsel %vm144, %v398, %v399
    %v403 = vsel %vm144, %v397, %v398
    %v404 = vsel %vm144, %v400, %v397
    %v405 = vmul.f32 %v403, %v119
    %v406 = vmul.f32 %v402, %v120
    %v407 = vmul.f32 %v401, %v121
    %v408 = vmul.f32 %v404, %v122
    %v409 = vld [vmem:[%s2] sm:$0xff]
    %v410 = vld [vmem:[%s2 + $0x8] sm:$0xff]
    %v411 = vld [vmem:[%s2 + $0x10] sm:$0xff]
    %v412 = vld [vmem:[%s2 + $0x18] sm:$0xff]
    %v413 = vld [vmem:[%s2 + $0x20] sm:$0xff]
    %v414 = vld [vmem:[%s2 + $0x28] sm:$0xff]
    %v415 = vld [vmem:[%s2 + $0x30] sm:$0xff]
    %v416 = vld [vmem:[%s2 + $0x38] sm:$0xff]
    %v417 = vld [vmem:[%s2 + $0x40] sm:$0xff]
    %v418 = vld [vmem:[%s2 + $0x48] sm:$0xff]
    %v419 = vld [vmem:[%s2 + $0x50] sm:$0xff]
    %v420 = vld [vmem:[%s2 + $0x58] sm:$0xff]
    %v421 = vld [vmem:[%s2 + $0x60] sm:$0xff]
    %v422 = vld [vmem:[%s2 + $0x68] sm:$0xff]
    %v423 = vld [vmem:[%s2 + $0x70] sm:$0xff]
    %v424 = vld [vmem:[%s2 + $0x78] sm:$0xff]
    %v425 = vld [vmem:[%s2 + $0x80] sm:$0xff]
    %v426 = vld [vmem:[%s2 + $0x88] sm:$0xff]
    %v427 = vld [vmem:[%s2 + $0x90] sm:$0xff]
    %v428 = vld [vmem:[%s2 + $0x98] sm:$0xff]
    %v429 = vld [vmem:[%s2 + $0xa0] sm:$0xff]
    %v430 = vld [vmem:[%s2 + $0xa8] sm:$0xff]
    %v431 = vld [vmem:[%s2 + $0xb0] sm:$0xff]
    %v432 = vld [vmem:[%s2 + $0xb8] sm:$0xff]
    %v433 = vld [vmem:[%s2 + $0xc0] sm:$0xff]
    %v434 = vld [vmem:[%s2 + $0xc8] sm:$0xff]
    %v435 = vld [vmem:[%s2 + $0xd0] sm:$0xff]
    %v436 = vld [vmem:[%s2 + $0xd8] sm:$0xff]
    %v437 = vld [vmem:[%s2 + $0xe0] sm:$0xff]
    %v438 = vld [vmem:[%s2 + $0xe8] sm:$0xff]
    %v439 = vld [vmem:[%s2 + $0xf0] sm:$0xff]
    %v440 = vld [vmem:[%s2 + $0xf8] sm:$0xff]
    %v441 = vld [vmem:[%s2 + $0x100] sm:$0xff]
    %v442 = vld [vmem:[%s2 + $0x108] sm:$0xff]
    %v443 = vld [vmem:[%s2 + $0x110] sm:$0xff]
    %v444 = vld [vmem:[%s2 + $0x118] sm:$0xff]
    %v445 = vld [vmem:[%s2 + $0x120] sm:$0xff]
    %v446 = vld [vmem:[%s2 + $0x128] sm:$0xff]
    %v447 = vld [vmem:[%s2 + $0x130] sm:$0xff]
    %v448 = vld [vmem:[%s2 + $0x138] sm:$0xff]
    %v449 = vld [vmem:[%s2 + $0x140] sm:$0xff]
    %v450 = vld [vmem:[%s2 + $0x148] sm:$0xff]
    %v451 = vld [vmem:[%s2 + $0x150] sm:$0xff]
    %v452 = vld [vmem:[%s2 + $0x158] sm:$0xff]
    %v453 = vld [vmem:[%s2 + $0x160] sm:$0xff]
    %v454 = vld [vmem:[%s2 + $0x168] sm:$0xff]
    %v455 = vld [vmem:[%s2 + $0x170] sm:$0xff]
    %v456 = vld [vmem:[%s2 + $0x178] sm:$0xff]
    %457 = vmatprep.subr.mxu0 0.0
    %458 = vmatpush1.msra.mxu0 %v409
    %459 = vmatprep.subr.mxu0 0.0
    %460 = vmatpush1.msra.mxu0 %v410
    %461 = vmatprep.subr.mxu0 0.0
    %462 = vmatpush1.msra.mxu0 %v411
    %463 = vmatprep.subr.mxu0 0.0
    %464 = vmatpush1.msra.mxu0 %v412
    %465 = vmatprep.subr.mxu0 0.0
    %466 = vmatpush1.msra.mxu0 %v413
    %467 = vmatprep.subr.mxu0 0.0
    %468 = vmatpush1.msra.mxu0 %v414
    %469 = vmatprep.subr.mxu0 0.0
    %470 = vmatpush1.msra.mxu0 %v415
    %471 = vmatprep.subr.mxu0 0.0
    %472 = vmatpush1.msra.mxu0 %v416
    %473 = vmatprep.subr.mxu0 0.0
    %474 = vmatpush1.msra.mxu0 %v417
    %475 = vmatprep.subr.mxu0 0.0
    %476 = vmatpush1.msra.mxu0 %v418
    %477 = vmatprep.subr.mxu0 0.0
    %478 = vmatpush1.msra.mxu0 %v419
    %479 = vmatprep.subr.mxu0 0.0
    %480 = vmatpush1.msra.mxu0 %v420
    %481 = vmatprep.subr.mxu0 0.0
    %482 = vmatpush1.msra.mxu0 %v421
    %483 = vmatprep.subr.mxu0 0.0
    %484 = vmatpush1.msra.mxu0 %v422
    %485 = vmatprep.subr.mxu0 0.0
    %486 = vmatpush1.msra.mxu0 %v423
    %487 = vmatprep.subr.mxu0 0.0
    %488 = vmatpush1.msra.mxu0 %v424
    %489 = vmatprep.subr.mxu0 0.0
    %490 = vmatpush1.msra.mxu0 %v425
    %491 = vmatprep.subr.mxu0 0.0
    %492 = vmatpush1.msra.mxu0 %v426
    %493 = vmatprep.subr.mxu0 0.0
    %494 = vmatpush1.msra.mxu0 %v427
    %495 = vmatprep.subr.mxu0 0.0
    %496 = vmatpush1.msra.mxu0 %v428
    %497 = vmatprep.subr.mxu0 0.0
    %498 = vmatpush1.msra.mxu0 %v429
    %499 = vmatprep.subr.mxu0 0.0
    %500 = vmatpush1.msra.mxu0 %v430
    %501 = vmatprep.subr.mxu0 0.0
    %502 = vmatpush1.msra.mxu0 %v431
    %503 = vmatprep.subr.mxu0 0.0
    %504 = vmatpush1.msra.mxu0 %v432
    %505 = vmatprep.subr.mxu0 0.0
    %506 = vmatpush1.msra.mxu0 %v433
    %507 = vmatprep.subr.mxu0 0.0
    %508 = vmatpush1.msra.mxu0 %v434
    %509 = vmatprep.subr.mxu0 0.0
    %510 = vmatpush1.msra.mxu0 %v435
    %511 = vmatprep.subr.mxu0 0.0
    %512 = vmatpush1.msra.mxu0 %v436
    %513 = vmatprep.subr.mxu0 0.0
    %514 = vmatpush1.msra.mxu0 %v437
    %515 = vmatprep.subr.mxu0 0.0
    %516 = vmatpush1.msra.mxu0 %v438
    %517 = vmatprep.subr.mxu0 0.0
    %518 = vmatpush1.msra.mxu0 %v439
    %519 = vmatprep.subr.mxu0 0.0
    %520 = vmatpush1.msra.mxu0 %v440
    %521 = vmatprep.mubr.f32.mxu0 %v381
    %522 = vmatmul.mubr.f32.gmra.mrb[0].mxu0 %v393
    %v523 = vpop.f32.mrb[0].mxu0
    %v524 = vadd.f32 0.0, %v523
    %v525 = vpop.f32.mrb[0].mxu0
    %526 = vmatprep.mubr.f32.mxu0 %v382
    %527 = vmatmul.mubr.f32.gmra.mrb[0].mxu0 %v394
    %v528 = vpop.f32.mrb[0].mxu0
    %v529 = vadd.f32 0.0, %v528
    %v530 = vpop.f32.mrb[0].mxu0
    %531 = vmatprep.mubr.f32.mxu0 %v383
    %532 = vmatmul.mubr.f32.gmra.mrb[0].mxu0 %v395
    %v533 = vpop.f32.mrb[0].mxu0
    %v534 = vadd.f32 0.0, %v533
    %v535 = vpop.f32.mrb[0].mxu0
    %536 = vmatprep.mubr.f32.mxu0 %v384
    %537 = vmatmul.mubr.f32.gmra.mrb[0].mxu0 %v396
    %v538 = vpop.f32.mrb[0].mxu0
    %v539 = vadd.f32 0.0, %v538
    %v540 = vpop.f32.mrb[0].mxu0
    %541 = vdwg.mxu0
    %542 = vmatprep.subr.mxu0 0.0
    %543 = vmatpush1.msra.mxu0 %v441
    %544 = vmatprep.subr.mxu0 0.0
    %545 = vmatpush1.msra.mxu0 %v442
    %546 = vmatprep.subr.mxu0 0.0
    %547 = vmatpush1.msra.mxu0 %v443
    %548 = vmatprep.subr.mxu0 0.0
    %549 = vmatpush1.msra.mxu0 %v444
    %550 = vmatprep.subr.mxu0 0.0
    %551 = vmatpush1.msra.mxu0 %v445
    %552 = vmatprep.subr.mxu0 0.0
    %553 = vmatpush1.msra.mxu0 %v446
    %554 = vmatprep.subr.mxu0 0.0
    %555 = vmatpush1.msra.mxu0 %v447
    %556 = vmatprep.subr.mxu0 0.0
    %557 = vmatpush1.msra.mxu0 %v448
    %558 = vmatprep.subr.mxu0 0.0
    %559 = vmatpush1.msra.mxu0 %v449
    %560 = vmatprep.subr.mxu0 0.0
    %561 = vmatpush1.msra.mxu0 %v450
    %562 = vmatprep.subr.mxu0 0.0
    %563 = vmatpush1.msra.mxu0 %v451
    %564 = vmatprep.subr.mxu0 0.0
    %565 = vmatpush1.msra.mxu0 %v452
    %566 = vmatprep.subr.mxu0 0.0
    %567 = vmatpush1.msra.mxu0 %v453
    %568 = vmatprep.subr.mxu0 0.0
    %569 = vmatpush1.msra.mxu0 %v454
    %570 = vmatprep.subr.mxu0 0.0
    %571 = vmatpush1.msra.mxu0 %v455
    %572 = vmatprep.subr.mxu0 0.0
    %573 = vmatpush1.msra.mxu0 %v456
    %574 = vmatprep.subr.mxu0 0.0
    %575 = vmatpush1.msra.mxu0 0.0
    %576 = vmatprep.subr.mxu0 0.0
    %577 = vmatpush1.msra.mxu0 0.0
    %578 = vmatprep.subr.mxu0 0.0
    %579 = vmatpush1.msra.mxu0 0.0
    %580 = vmatprep.subr.mxu0 0.0
    %581 = vmatpush1.msra.mxu0 0.0
    %582 = vmatprep.subr.mxu0 0.0
    %583 = vmatpush1.msra.mxu0 0.0
    %584 = vmatprep.subr.mxu0 0.0
    %585 = vmatpush1.msra.mxu0 0.0
    %586 = vmatprep.subr.mxu0 0.0
    %587 = vmatpush1.msra.mxu0 0.0
    %588 = vmatprep.subr.mxu0 0.0
    %589 = vmatpush1.msra.mxu0 0.0
    %590 = vmatprep.subr.mxu0 0.0
    %591 = vmatpush1.msra.mxu0 0.0
    %592 = vmatprep.subr.mxu0 0.0
    %593 = vmatpush1.msra.mxu0 0.0
    %594 = vmatprep.subr.mxu0 0.0
    %595 = vmatpush1.msra.mxu0 0.0
    %596 = vmatprep.subr.mxu0 0.0
    %597 = vmatpush1.msra.mxu0 0.0
    %598 = vmatprep.subr.mxu0 0.0
    %599 = vmatpush1.msra.mxu0 0.0
    %600 = vmatprep.subr.mxu0 0.0
    %601 = vmatpush1.msra.mxu0 0.0
    %602 = vmatprep.subr.mxu0 0.0
    %603 = vmatpush1.msra.mxu0 0.0
    %604 = vmatprep.subr.mxu0 0.0
    %605 = vmatpush1.msra.mxu0 0.0
    %606 = vmatprep.mubr.f32.mxu0 0.0
    %607 = vmatmul.mubr.f32.gmra.mrb[0].mxu0 %v405
    %v608 = vpop.f32.mrb[0].mxu0
    %v609 = vadd.f32 %v524, %v608
    %v610 = vpop.f32.mrb[0].mxu0
    %611 = vmatprep.mubr.f32.mxu0 0.0
    %612 = vmatmul.mubr.f32.gmra.mrb[0].mxu0 %v406
    %v613 = vpop.f32.mrb[0].mxu0
    %v614 = vadd.f32 %v529, %v613
    %v615 = vpop.f32.mrb[0].mxu0
    %616 = vmatprep.mubr.f32.mxu0 0.0
    %617 = vmatmul.mubr.f32.gmra.mrb[0].mxu0 %v407
    %v618 = vpop.f32.mrb[0].mxu0
    %v619 = vadd.f32 %v534, %v618
    %v620 = vpop.f32.mrb[0].mxu0
    %621 = vmatprep.mubr.f32.mxu0 0.0
    %622 = vmatmul.mubr.f32.gmra.mrb[0].mxu0 %v408
    %v623 = vpop.f32.mrb[0].mxu0
    %v624 = vadd.f32 %v539, %v623
    %v625 = vpop.f32.mrb[0].mxu0
    %626 = vdwg.mxu0
    %v627 = vld [vmem:[%s7] sm:$0x1]
    %v628 = vld [vmem:[%s8] sm:$0x1]
    %v629 = vadd.f32 %v609, %v614
    %v630 = vadd.f32 %v629, %v619
    %v631 = vadd.f32 %v630, %v624
    %v632 = vrot.slane %v631, 4
    %v633 = vadd.f32 %v631, %v632
    %v634 = vrot.slane %v633, 2
    %v635 = vadd.f32 %v633, %v634
    %v636 = vrot.slane %v635, 1
    %v637 = vadd.f32 %v635, %v636
    %v638 = vmul.f32 %v609, %v609
    %v639 = vmul.f32 %v614, %v614
    %v640 = vmul.f32 %v619, %v619
    %v641 = vmul.f32 %v624, %v624
    %v642 = vadd.f32 %v638, %v639
    %v643 = vadd.f32 %v642, %v640
    %v644 = vadd.f32 %v643, %v641
    %v645 = vrot.slane %v644, 4
    %v646 = vadd.f32 %v644, %v645
    %v647 = vrot.slane %v646, 2
    %v648 = vadd.f32 %v646, %v647
    %v649 = vrot.slane %v648, 1
    %v650 = vadd.f32 %v648, %v649
    %v651 = vsel %vm319, %v637, %v650
    %652 = vrot.lane.b32.xlu0 %v651, 8
    %v653 = vpop.permute.xlu0 %652
    %v654 = vadd.f32 %v651, %v653
    %655 = vrot.lane.b32.xlu0 %v654, 16
    %v656 = vpop.permute.xlu0 %655
    %v657 = vadd.f32 %v654, %v656
    %658 = vrot.lane.b32.xlu0 %v657, 32
    %v659 = vpop.permute.xlu0 %658
    %v660 = vadd.f32 %v657, %v659
    %661 = vrot.lane.b32.xlu0 %v660, 64
    %v662 = vpop.permute.xlu0 %661
    %v663 = vadd.f32 %v660, %v662
    %v664 = vmul.f32 %v663, 0.001953125
    %v665 = vmul.f32 %v664, %v664
    %v667 = vrot.slane %v665, 7
    %v669 = vsub.f32 %v664, %v667
    %v670 = vadd.f32 %v669, 1e-05
    %v671 = vrsqrt.pop %v670
    %v674 = vunpack.c.l.s4 1966171168
    %v675 = vunpack.c.0.s8 %v674
    %v676 = vlaneseq
    %v677 = vshrl.u32 %v676, 7
    %v678 = vsub.s32 %v675, %v677
    %v679 = vrot.slane %v671, %v678
    %v680 = vcombine.high %v679, %v679
    %v682 = vunpack.c.l.s4 1966171168
    %v683 = vunpack.c.0.s8 %v682
    %v684 = vlaneseq
    %v685 = vshrl.u32 %v684, 7
    %v686 = vsub.s32 %v683, %v685
    %v687 = vrot.slane %v680, %v686
    %v689 = vmul.f32 %v627, %v687
    %v691 = vlaneseq
    %v692 = vshrl.u32 %v691, 7
    %v693 = vsub.s32 0, %v692
    %v694 = vrot.slane %v689, %v693
    %v696 = vmul.f32 %v609, %v694
    %v697 = vmul.f32 %v614, %v694
    %v698 = vmul.f32 %v619, %v694
    %v699 = vmul.f32 %v624, %v694
    %v700 = vmul.f32 %v664, %v689
    %v701 = vsub.f32 %v628, %v700
    %v703 = vlaneseq
    %v704 = vshrl.u32 %v703, 7
    %v705 = vsub.s32 0, %v704
    %v706 = vrot.slane %v701, %v705
    %v708 = vadd.f32 %v696, %v706
    %v709 = vadd.f32 %v697, %v706
    %v710 = vadd.f32 %v698, %v706
    %v711 = vadd.f32 %v699, %v706
    %v712 = vld [vmem:[%s3] sm:$0xff]
    %v713 = vld [vmem:[%s3 + $0x8] sm:$0xff]
    %v714 = vld [vmem:[%s3 + $0x10] sm:$0xff]
    %v715 = vld [vmem:[%s3 + $0x18] sm:$0xff]
    %v716 = vld [vmem:[%s3 + $0x20] sm:$0xff]
    %v717 = vld [vmem:[%s3 + $0x28] sm:$0xff]
    %v718 = vld [vmem:[%s3 + $0x30] sm:$0xff]
    %v719 = vld [vmem:[%s3 + $0x38] sm:$0xff]
    %v720 = vld [vmem:[%s4] sm:$0x1]
    %v722 = vlaneseq
    %v723 = vshrl.u32 %v722, 7
    %v724 = vsub.s32 0, %v723
    %v725 = vrot.slane %v720, %v724
    %v727 = vsel %vm169, %v123, 0
    %v729 = vsel %vm169, %v124, 0
    %v731 = vsel %vm169, %v125, 0
    %v733 = vsel %vm169, %v126, 0
    %735 = vmatprep.subr.mxu0 0.0
    %736 = vmatpush1.msra.mxu0 %v712
    %737 = vmatprep.subr.mxu0 0.0
    %738 = vmatpush1.msra.mxu0 %v713
    %739 = vmatprep.subr.mxu0 0.0
    %740 = vmatpush1.msra.mxu0 %v714
    %741 = vmatprep.subr.mxu0 0.0
    %742 = vmatpush1.msra.mxu0 %v715
    %743 = vmatprep.subr.mxu0 0.0
    %744 = vmatpush1.msra.mxu0 %v716
    %745 = vmatprep.subr.mxu0 0.0
    %746 = vmatpush1.msra.mxu0 %v717
    %747 = vmatprep.subr.mxu0 0.0
    %748 = vmatpush1.msra.mxu0 %v718
    %749 = vmatprep.subr.mxu0 0.0
    %750 = vmatpush1.msra.mxu0 %v719
    %751 = vmatprep.subr.mxu0 0.0
    %752 = vmatpush1.msra.mxu0 0.0
    %753 = vmatprep.subr.mxu0 0.0
    %754 = vmatpush1.msra.mxu0 0.0
    %755 = vmatprep.subr.mxu0 0.0
    %756 = vmatpush1.msra.mxu0 0.0
    %757 = vmatprep.subr.mxu0 0.0
    %758 = vmatpush1.msra.mxu0 0.0
    %759 = vmatprep.subr.mxu0 0.0
    %760 = vmatpush1.msra.mxu0 0.0
    %761 = vmatprep.subr.mxu0 0.0
    %762 = vmatpush1.msra.mxu0 0.0
    %763 = vmatprep.subr.mxu0 0.0
    %764 = vmatpush1.msra.mxu0 0.0
    %765 = vmatprep.subr.mxu0 0.0
    %766 = vmatpush1.msra.mxu0 0.0
    %767 = vmatprep.subr.mxu0 0.0
    %768 = vmatpush1.msra.mxu0 0.0
    %769 = vmatprep.subr.mxu0 0.0
    %770 = vmatpush1.msra.mxu0 0.0
    %771 = vmatprep.subr.mxu0 0.0
    %772 = vmatpush1.msra.mxu0 0.0
    %773 = vmatprep.subr.mxu0 0.0
    %774 = vmatpush1.msra.mxu0 0.0
    %775 = vmatprep.subr.mxu0 0.0
    %776 = vmatpush1.msra.mxu0 0.0
    %777 = vmatprep.subr.mxu0 0.0
    %778 = vmatpush1.msra.mxu0 0.0
    %779 = vmatprep.subr.mxu0 0.0
    %780 = vmatpush1.msra.mxu0 0.0
    %781 = vmatprep.subr.mxu0 0.0
    %782 = vmatpush1.msra.mxu0 0.0
    %783 = vmatprep.subr.mxu0 0.0
    %784 = vmatpush1.msra.mxu0 0.0
    %785 = vmatprep.subr.mxu0 0.0
    %786 = vmatpush1.msra.mxu0 0.0
    %787 = vmatprep.subr.mxu0 0.0
    %788 = vmatpush1.msra.mxu0 0.0
    %789 = vmatprep.subr.mxu0 0.0
    %790 = vmatpush1.msra.mxu0 0.0
    %791 = vmatprep.subr.mxu0 0.0
    %792 = vmatpush1.msra.mxu0 0.0
    %793 = vmatprep.subr.mxu0 0.0
    %794 = vmatpush1.msra.mxu0 0.0
    %795 = vmatprep.subr.mxu0 0.0
    %796 = vmatpush1.msra.mxu0 0.0
    %797 = vmatprep.subr.mxu0 0.0
    %798 = vmatpush1.msra.mxu0 0.0
    %799 = vmatprep.mubr.f32.mxu0 0.0
    %800 = vmatmul.mubr.f32.gmra.mrb[0].mxu0 %v727
    %v801 = vpop.f32.mrb[0].mxu0
    %v802 = vadd.f32 %v725, %v801
    %v803 = vpop.f32.mrb[0].mxu0
    %804 = vmatprep.mubr.f32.mxu0 0.0
    %805 = vmatmul.mubr.f32.gmra.mrb[0].mxu0 %v729
    %v806 = vpop.f32.mrb[0].mxu0
    %v807 = vadd.f32 %v725, %v806
    %v808 = vpop.f32.mrb[0].mxu0
    %809 = vmatprep.mubr.f32.mxu0 0.0
    %810 = vmatmul.mubr.f32.gmra.mrb[0].mxu0 %v731
    %v811 = vpop.f32.mrb[0].mxu0
    %v812 = vadd.f32 %v725, %v811
    %v813 = vpop.f32.mrb[0].mxu0
    %814 = vmatprep.mubr.f32.mxu0 0.0
    %815 = vmatmul.mubr.f32.gmra.mrb[0].mxu0 %v733
    %v816 = vpop.f32.mrb[0].mxu0
    %v817 = vadd.f32 %v725, %v816
    %v818 = vpop.f32.mrb[0].mxu0
    %819 = vdwg.mxu0
    %v820 = vadd.f32 %v708, %v802
    %v821 = vadd.f32 %v709, %v807
    %v822 = vadd.f32 %v710, %v812
    %v823 = vadd.f32 %v711, %v817
    %v824 = vmax.f32 %v820, 0.0
    %v825 = vmax.f32 %v821, 0.0
    %v826 = vmax.f32 %v822, 0.0
    %v827 = vmax.f32 %v823, 0.0
    %828 = vst [vmem:[%s9] sm:$0xff] %v824
    %829 = vst [vmem:[%s9 + $0x8] sm:$0xff] %v825
    %830 = vst [vmem:[%s9 + $0x10] sm:$0xff] %v826
    %831 = vst [vmem:[%s9 + $0x18] sm:$0xff] %v827
    // Predicated region
    $region42: #{_residual_forward_jit.1} parent=1 // pred_check
      _
    $region43: #{_residual_forward_jit.1} parent=1 // pred_check_branch
      %833 = sbr.rel (0) target = $region45
    $region44: #{_residual_forward_jit.1} parent=1 // pred_region
      _
    $region45: #{_residual_forward_jit.1} parent=1 // pred_fallthru
      _
    // Predicated region
    $region46: #{_residual_forward_jit.1} parent=1 // pred_check
      _
    $region47: #{_residual_forward_jit.1} parent=1 // pred_check_branch
      %835 = sbr.rel (0) target = $region49
    $region48: #{_residual_forward_jit.1} parent=1 // pred_region
      _
    $region49: #{_residual_forward_jit.1} parent=1 // pred_fallthru
      _
    %836 = vsyncpa [#allocation3], 1

</llo_original>
